<compile_context>
chip_gen: v6e
topology: v6e:2x2x1
jax: 0.10.0
libtpu: 0.0.40
codegen_flags: <defaults>
</compile_context>

<pallas_src>
import jax
import jax.numpy as jnp
from jax.experimental import pallas as pl
from jax.experimental.pallas import tpu as pltpu


def _round_up(x, m):
    return (x + m - 1) // m * m


def _cdiv(a, b):
    return (a + b - 1) // b


def modified_fc_kernel(x_ref, w_ref, b_ref, t1_ref, t2_ref, o_ref):
    # Linear layer on the MXU, f32 accumulation.
    y = jnp.dot(x_ref[...], w_ref[...], preferred_element_type=jnp.float32)
    # Sine nonlinearity.  TODO(synk): on v7x check the bundle dump — sin's
    # range-reduction polynomial may make this VALU-bound at 3.2 TB/s HBM;
    # if so compute sin/blend in bf16.
    out = jnp.sin(y + b_ref[...].astype(jnp.float32))
    t1 = t1_ref[...].astype(jnp.float32)
    t2 = t2_ref[...].astype(jnp.float32)
    # (1 - out) * t1 + out * t2  ==  out * (t2 - t1) + t1   (saves one vmul)
    o_ref[...] = (out * (t2 - t1) + t1).astype(o_ref.dtype)


def prepare_params(weight, bias):
    """One-time parameter prep (call at model-init time, NOT per forward):
    transpose PyTorch-layout weight (out_f, in_f) -> (in_f, out_f), bias -> 2D."""
    out_f, _ = weight.shape
    return weight.T, bias.reshape(1, out_f)


def _vmem_capacity_bytes():
    try:
        return int(pltpu.get_tpu_info().vmem_capacity_bytes)
    except Exception:
        return 64 * 1024 * 1024  # v7x-safe fallback (per-TC VMEM)


def _choose_tiles(M, in_f, out_f, itemsize, budget, block_m, block_n):
    """Pick (tm, tn).  tn == out_f keeps the whole W^T resident; otherwise tn is
    a multiple of 128 and the grid gets an outer N axis."""
    m8 = _round_up(max(M, 1), 8)

    def resident(tn):      # W^T slice + bias: single-buffered (pl.Buffered(1))
        return (in_f + 1) * tn * itemsize

    def per_step(tm, tn):  # x, t1, t2, out streams: double-buffered
        return 2 * tm * (in_f + 3 * tn) * itemsize

    def fit_tm(tn):
        tm = min(_round_up(block_m, 8), m8)
        while tm > 8 and per_step(tm, tn) + resident(tn) > budget:
            tm = max(8, _round_up(tm // 2, 8))
        return tm

    # Preferred: whole W^T resident (single N tile).
    tn = out_f
    tm = fit_tm(tn)
    oversize = per_step(8, out_f) + resident(out_f) > budget
    few_m_tiles = _cdiv(m8, tm) < 2

    if out_f > 128 and (oversize or (few_m_tiles and out_f >= 256)):
        # Tile the output-feature axis (helps v7x: 2 TCs, 64 MiB/TC VMEM).
        tn = max(128, (min(block_n, _round_up(out_f, 128)) // 128) * 128)
        while tn > 128 and per_step(8, tn) + resident(tn) > budget:
            tn = max(128, ((tn // 2) // 128) * 128)
        tm = fit_tm(tn)

    # Full-extent blocks are always legal (and needed when the dim isn't a
    # multiple of the tiling unit).
    if tm >= M:
        tm = M
    if tn >= out_f:
        tn = out_f
    return tm, tn


def modified_fc(x, w_t, b2d, trans_1, trans_2, *, block_m=1024, block_n=256):
    """x: (M, in_f); w_t/b2d: from prepare_params(); trans_1/trans_2: (M, out_f).
    Returns (M, out_f)."""
    M, in_f = x.shape
    in_f_w, out_f = w_t.shape
    assert in_f == in_f_w and trans_1.shape == (M, out_f) == trans_2.shape
    dtype = x.dtype
    itemsize = jnp.dtype(dtype).itemsize

    # Generation-aware VMEM budget (≈64 MiB on v5e/v6e, ≈29 MiB on v7x).
    vmem_cap = _vmem_capacity_bytes()
    budget = max(16 * 1024 * 1024, int(vmem_cap * 0.45))
    tm, tn = _choose_tiles(M, in_f, out_f, itemsize, budget, block_m, block_n)

    # Compiler VMEM limit derived from the actual footprint (+ headroom),
    # clamped to physical capacity.
    resident_bytes = (in_f + 1) * tn * itemsize          # single-buffered W^T + bias
    per_step_bytes = 2 * tm * (in_f + 3 * tn) * itemsize  # double-buffered streams
    vmem_limit = min(int(vmem_cap * 0.9),
                     per_step_bytes + resident_bytes + 8 * 1024 * 1024)

    # Grid: N outer (so the resident W^T slice is reused across all inner M
    # tiles), M inner.  Last blocks may be ragged (masked tail load/store)
    # instead of materializing padded copies of the HBM streams.
    grid = (_cdiv(out_f, tn), _cdiv(M, tm))

    return pl.pallas_call(
        modified_fc_kernel,
        out_shape=jax.ShapeDtypeStruct((M, out_f), dtype),
        grid=grid,
        in_specs=[
            pl.BlockSpec((tm, in_f), lambda n, m: (m, 0)),          # x: streamed over M
            pl.BlockSpec((in_f, tn), lambda n, m: (0, n),
                         pipeline_mode=pl.Buffered(1)),             # W^T: resident
            pl.BlockSpec((1, tn), lambda n, m: (0, n),
                         pipeline_mode=pl.Buffered(1)),             # bias: resident
            pl.BlockSpec((tm, tn), lambda n, m: (m, n)),            # trans_1: streamed
            pl.BlockSpec((tm, tn), lambda n, m: (m, n)),            # trans_2: streamed
        ],
        out_specs=pl.BlockSpec((tm, tn), lambda n, m: (m, n)),
        compiler_params=pltpu.CompilerParams(
            dimension_semantics=("parallel", "parallel"),           # megacore-friendly
            vmem_limit_bytes=vmem_limit,
        ),
    )(x, w_t, b2d, trans_1, trans_2)


def reference(x, weight, bias, trans_1, trans_2):
    out = jnp.sin(x @ weight.T + bias)
    return (1.0 - out) * trans_1 + out * trans_2


if __name__ == "__main__":
    # Small shapes implied by the module: a batch of feature vectors.
    M, in_features, out_features = 8, 32, 32

    key = jax.random.PRNGKey(0)
    kx, kw, kb, kt1, kt2 = jax.random.split(key, 5)

    x = jax.random.normal(kx, (M, in_features), dtype=jnp.float32)

    # Deterministic xavier_normal_ for the Linear weight (std = sqrt(2/(fan_in+fan_out))).
    xavier_std = (2.0 / (in_features + out_features)) ** 0.5
    weight = xavier_std * jax.random.normal(
        kw, (out_features, in_features), dtype=jnp.float32)
    # PyTorch Linear default bias init: U(-1/sqrt(fan_in), 1/sqrt(fan_in)).
    bound = 1.0 / (in_features ** 0.5)
    bias = jax.random.uniform(
        kb, (out_features,), minval=-bound, maxval=bound, dtype=jnp.float32)

    trans_1 = jax.random.normal(kt1, (M, out_features), dtype=jnp.float32)
    trans_2 = jax.random.normal(kt2, (M, out_features), dtype=jnp.float32)

    # One-time parameter prep (transpose) — not part of the per-call path.
    w_t, b2d = prepare_params(weight, bias)

    y = modified_fc(x, w_t, b2d, trans_1, trans_2)
    y = jax.block_until_ready(y)

    y_ref = reference(x, weight, bias, trans_1, trans_2)
    assert y.shape == (M, out_features)
    assert jnp.allclose(y, y_ref, atol=1e-5, rtol=1e-5), "mismatch vs reference"

    print("KERNEL_OK")
</pallas_src>

<mosaic_0001>
module attributes {stable_mosaic.version = 11 : i64} {
  func.func @modified_fc_kernel(%arg0: i32, %arg1: i32, %arg2: memref<8x32xf32, #tpu.memory_space<vmem>>, %arg3: memref<32x32xf32, #tpu.memory_space<vmem>>, %arg4: memref<1x32xf32, #tpu.memory_space<vmem>>, %arg5: memref<8x32xf32, #tpu.memory_space<vmem>>, %arg6: memref<8x32xf32, #tpu.memory_space<vmem>>, %arg7: memref<8x32xf32, #tpu.memory_space<vmem>>) attributes {dimension_semantics = [#tpu.dimension_semantics<parallel>, #tpu.dimension_semantics<parallel>], iteration_bounds = array<i64: 1, 1>, scalar_prefetch = 0 : i64, scratch_operands = 0 : i64, tpu.core_type = #tpu.core_type<tc>, window_params = [{transform_indices = @transform_0, window_bounds = array<i64: 8, 32>}, {pipeline_mode = #tpu.pipeline_mode<synchronous>, transform_indices = @transform_1, window_bounds = array<i64: 32, 32>}, {pipeline_mode = #tpu.pipeline_mode<synchronous>, transform_indices = @transform_2, window_bounds = array<i64: 1, 32>}, {transform_indices = @transform_3, window_bounds = array<i64: 8, 32>}, {transform_indices = @transform_4, window_bounds = array<i64: 8, 32>}, {transform_indices = @transform_5, window_bounds = array<i64: 8, 32>}]} {
    %c0 = arith.constant 0 : index
    %c0_0 = arith.constant 0 : index
    %0 = vector.load %arg2[%c0, %c0_0] : memref<8x32xf32, #tpu.memory_space<vmem>>, vector<8x32xf32>
    %c0_1 = arith.constant 0 : index
    %c0_2 = arith.constant 0 : index
    %1 = vector.load %arg3[%c0_1, %c0_2] : memref<32x32xf32, #tpu.memory_space<vmem>>, vector<32x32xf32>
    %cst = arith.constant dense<0.000000e+00> : vector<8x32xf32>
    %2 = tpu.matmul %0, %1, %cst {dimension_numbers = #tpu.dot_dimension_numbers<[1], [0], [0], [1], [0, 0, 1, 1], [], []>} : vector<8x32xf32>, vector<32x32xf32>, vector<8x32xf32> -> vector<8x32xf32>
    %c0_3 = arith.constant 0 : index
    %c0_4 = arith.constant 0 : index
    %3 = vector.load %arg4[%c0_3, %c0_4] : memref<1x32xf32, #tpu.memory_space<vmem>>, vector<1x32xf32>
    %4 = vector.broadcast %3 : vector<1x32xf32> to vector<8x32xf32>
    %5 = arith.addf %2, %4 : vector<8x32xf32>
    %6 = math.sin %5 : vector<8x32xf32>
    %c0_5 = arith.constant 0 : index
    %c0_6 = arith.constant 0 : index
    %7 = vector.load %arg5[%c0_5, %c0_6] : memref<8x32xf32, #tpu.memory_space<vmem>>, vector<8x32xf32>
    %c0_7 = arith.constant 0 : index
    %c0_8 = arith.constant 0 : index
    %8 = vector.load %arg6[%c0_7, %c0_8] : memref<8x32xf32, #tpu.memory_space<vmem>>, vector<8x32xf32>
    %9 = arith.subf %8, %7 : vector<8x32xf32>
    %10 = arith.mulf %6, %9 : vector<8x32xf32>
    %11 = arith.addf %10, %7 : vector<8x32xf32>
    %c0_9 = arith.constant 0 : index
    %c0_10 = arith.constant 0 : index
    %12 = vector.load %arg7[%c0_9, %c0_10] : memref<8x32xf32, #tpu.memory_space<vmem>>, vector<8x32xf32>
    tpu.vector_store %arg7[%c0_9, %c0_10], %11 {strides = array<i32>} : memref<8x32xf32, #tpu.memory_space<vmem>>, vector<8x32xf32>,
    return
  }
  func.func @transform_0(%arg0: i32, %arg1: i32) -> (i32, i32) {
    %c0_i32 = arith.constant 0 : i32
    %c0_i32_0 = arith.constant 0 : i32
    return %arg1, %c0_i32 : i32, i32
  }
  func.func @transform_1(%arg0: i32, %arg1: i32) -> (i32, i32) {
    %c0_i32 = arith.constant 0 : i32
    %c0_i32_0 = arith.constant 0 : i32
    return %c0_i32, %arg0 : i32, i32
  }
  func.func @transform_2(%arg0: i32, %arg1: i32) -> (i32, i32) {
    %c0_i32 = arith.constant 0 : i32
    %c0_i32_0 = arith.constant 0 : i32
    return %c0_i32, %arg0 : i32, i32
  }
  func.func @transform_3(%arg0: i32, %arg1: i32) -> (i32, i32) {
    %c0_i32 = arith.constant 0 : i32
    return %arg1, %arg0 : i32, i32
  }
  func.func @transform_4(%arg0: i32, %arg1: i32) -> (i32, i32) {
    %c0_i32 = arith.constant 0 : i32
    return %arg1, %arg0 : i32, i32
  }
  func.func @transform_5(%arg0: i32, %arg1: i32) -> (i32, i32) {
    %c0_i32 = arith.constant 0 : i32
    return %arg1, %arg0 : i32, i32
  }
}

</mosaic_0001>

<llo_original>
// kernel: tpu_custom_call.1
$region0: #{tpu_custom_call.1}
  #allocation0 [shape = 'u32[]', space=smem, size = 0x4, offset = 0x4, fixed_abs, tag = 'smem constant byte address 0x4 - core index']
  #allocation1 [shape = 'u32[144,128]{1,0:T(1,128)}', space=vmem, size = 0x12000, scoped, tag = 'internal scratch']
  %s0 = inlined_call_operand.hbm [shape: f32[8,32], index: 0, kind: input, shape index: {}]
  %s1 = inlined_call_operand.hbm [shape: f32[32,32], index: 1, kind: input, shape index: {}]
  %s2 = inlined_call_operand.vmem [shape: f32[1,32], index: 2, kind: input, shape index: {}]
  %s3 = inlined_call_operand.hbm [shape: f32[8,32], index: 3, kind: input, shape index: {}]
  %s4 = inlined_call_operand.hbm [shape: f32[8,32], index: 4, kind: input, shape index: {}]
  %s5 = inlined_call_operand.hbm [shape: f32[8,32], index: 5, kind: output, shape index: {}]
  %s6 = sld [smem:[#allocation0]]
  $region46: #{tpu_custom_call.1} parent=0
    _
  %s8 = ssub.s32 1, %s6
  %s9 = scalar_select 0, %s8, %s6
  $region1: #{tpu_custom_call.1} parent=0
    #allocation2 [shape = 'u8[4096]{0}', space=vmem, size = 0x1000, scoped, tag = 'input window, operand 0, single buffered']
    #allocation3 [shape = 's32[1]{0}', space=sflag, size = 0x4, scoped, tag = 'scoped memory for tpu_custom_call.1']
    #allocation4 [shape = 's32[1]{0}', space=sflag, size = 0x4, scoped, tag = 'scoped memory for tpu_custom_call.1']
    #allocation5 [shape = 'u8[16384]{0}', space=vmem, size = 0x4000, scoped, tag = 'input window, operand 1, single buffered']
    #allocation6 [shape = 's32[1]{0}', space=sflag, size = 0x4, scoped, tag = 'scoped memory for tpu_custom_call.1']
    #allocation7 [shape = 'u8[4096]{0}', space=vmem, size = 0x1000, scoped, tag = 'input window, operand 3, single buffered']
    #allocation8 [shape = 'u8[4096]{0}', space=vmem, size = 0x1000, scoped, tag = 'input window, operand 4, single buffered']
    #allocation9 [shape = 's32[1]{0}', space=sflag, size = 0x4, scoped, tag = 'scoped memory for tpu_custom_call.1']
    #allocation10 [shape = 'u8[4096]{0}', space=vmem, size = 0x1000, scoped, tag = 'output window, operand 0, single buffered']
    %10 = vsyncpa [#allocation3], 0
    %11 = vsyncpa [#allocation6], 0
    %12 = vsyncpa [#allocation9], 0
    %13 = vsyncpa [#allocation4], 0
    // Predicated region
    $region2: #{tpu_custom_call.1} parent=1 // pred_check
      _
    $region3: #{tpu_custom_call.1} parent=1 // pred_check_branch
      %15 = sbr.rel (0) target = $region5
    $region4: #{tpu_custom_call.1} parent=1 // pred_region
      %s17 = ssub.s32 128, 128
      %18 = vsyncadd [#allocation3], %s17
      %s20 = sshll.u32 [#allocation2], 4
      %s21 = int_to_ptr.vmem [resolvable:$true] %s20
      %23 = dma.hbm_to_vmem [thread:$0]  %s0, 128, %s21, [#allocation3]
    $region5: #{tpu_custom_call.1} parent=1 // pred_fallthru
      _
    // Predicated region
    $region6: #{tpu_custom_call.1} parent=1 // pred_check
      _
    $region7: #{tpu_custom_call.1} parent=1 // pred_check_branch
      %25 = sbr.rel (0) target = $region9
    $region8: #{tpu_custom_call.1} parent=1 // pred_region
      %s27 = ssub.s32 512, 512
      %28 = vsyncadd [#allocation6], %s27
      %s29 = sshll.u32 [#allocation5], 4
      %s30 = int_to_ptr.vmem [resolvable:$true] %s29
      %35 = dma.hbm_to_vmem [thread:$0]  %s1, 512, %s30, [#allocation6], 128, 128, 8
    $region9: #{tpu_custom_call.1} parent=1 // pred_fallthru
      _
    // Predicated region
    $region10: #{tpu_custom_call.1} parent=1 // pred_check
      _
    $region11: #{tpu_custom_call.1} parent=1 // pred_check_branch
      %37 = sbr.rel (0) target = $region13
    $region12: #{tpu_custom_call.1} parent=1 // pred_region
      _
    $region13: #{tpu_custom_call.1} parent=1 // pred_fallthru
      _
    // Predicated region
    $region14: #{tpu_custom_call.1} parent=1 // pred_check
      _
    $region15: #{tpu_custom_call.1} parent=1 // pred_check_branch
      %39 = sbr.rel (0) target = $region17
    $region16: #{tpu_custom_call.1} parent=1 // pred_region
      %s41 = ssub.s32 128, 128
      %42 = vsyncadd [#allocation6], %s41
      %s44 = sshll.u32 [#allocation7], 4
      %s45 = int_to_ptr.vmem [resolvable:$true] %s44
      %47 = dma.hbm_to_vmem [thread:$0]  %s3, 128, %s45, [#allocation6]
    $region17: #{tpu_custom_call.1} parent=1 // pred_fallthru
      _
    // Predicated region
    $region18: #{tpu_custom_call.1} parent=1 // pred_check
      _
    $region19: #{tpu_custom_call.1} parent=1 // pred_check_branch
      %49 = sbr.rel (0) target = $region21
    $region20: #{tpu_custom_call.1} parent=1 // pred_region
      %s51 = ssub.s32 128, 128
      %52 = vsyncadd [#allocation9], %s51
      %s54 = sshll.u32 [#allocation8], 4
      %s55 = int_to_ptr.vmem [resolvable:$true] %s54
      %57 = dma.hbm_to_vmem [thread:$0]  %s4, 128, %s55, [#allocation9]
    $region21: #{tpu_custom_call.1} parent=1 // pred_fallthru
      _
    // Predicated region
    $region22: #{tpu_custom_call.1} parent=1 // pred_check
      _
    $region23: #{tpu_custom_call.1} parent=1 // pred_check_branch
      %59 = sbr.rel (0) target = $region25
    $region24: #{tpu_custom_call.1} parent=1 // pred_region
      %60 = dma.done [#allocation3], 128
    $region25: #{tpu_custom_call.1} parent=1 // pred_fallthru
      _
    // Predicated region
    $region26: #{tpu_custom_call.1} parent=1 // pred_check
      _
    $region27: #{tpu_custom_call.1} parent=1 // pred_check_branch
      %62 = sbr.rel (0) target = $region29
    $region28: #{tpu_custom_call.1} parent=1 // pred_region
      %63 = dma.done [#allocation6], 512
    $region29: #{tpu_custom_call.1} parent=1 // pred_fallthru
      _
    // Predicated region
    $region30: #{tpu_custom_call.1} parent=1 // pred_check
      _
    $region31: #{tpu_custom_call.1} parent=1 // pred_check_branch
      %65 = sbr.rel (0) target = $region33
    $region32: #{tpu_custom_call.1} parent=1 // pred_region
      %66 = dma.done [#allocation6], 128
    $region33: #{tpu_custom_call.1} parent=1 // pred_fallthru
      _
    // Predicated region
    $region34: #{tpu_custom_call.1} parent=1 // pred_check
      _
    $region35: #{tpu_custom_call.1} parent=1 // pred_check_branch
      %68 = sbr.rel (0) target = $region37
    $region36: #{tpu_custom_call.1} parent=1 // pred_region
      %69 = dma.done [#allocation9], 128
    $region37: #{tpu_custom_call.1} parent=1 // pred_fallthru
      _
    %v70 = vld [vmem:[#allocation2] sm:$0xff]
    %v71 = vld [vmem:[#allocation5] sm:$0xff]
    %v72 = vld [vmem:[#allocation5 + $0x8] sm:$0xff]
    %v73 = vld [vmem:[#allocation5 + $0x10] sm:$0xff]
    %v74 = vld [vmem:[#allocation5 + $0x18] sm:$0xff]
    %v75 = vld [vmem:[%s2] sm:$0x1]
    %v77 = vlaneseq
    %v78 = vshrl.u32 %v77, 7
    %v79 = vsub.s32 0, %v78
    %v80 = vrot.slane %v75, %v79
    %vm82 = vcmask 261120
    %v84 = vsel %vm82, %v70, 0
    %86 = vmatprep.subr.mxu0 0.0
    %87 = vmatpush1.msra.mxu0 0.0
    %88 = vmatprep.subr.mxu0 0.0
    %89 = vmatpush1.msra.mxu0 0.0
    %90 = vmatprep.subr.mxu0 0.0
    %91 = vmatpush1.msra.mxu0 0.0
    %92 = vmatprep.subr.mxu0 0.0
    %93 = vmatpush1.msra.mxu0 0.0
    %94 = vmatprep.subr.mxu0 0.0
    %95 = vmatpush1.msra.mxu0 0.0
    %96 = vmatprep.subr.mxu0 0.0
    %97 = vmatpush1.msra.mxu0 0.0
    %98 = vmatprep.subr.mxu0 0.0
    %99 = vmatpush1.msra.mxu0 0.0
    %100 = vmatprep.subr.mxu0 0.0
    %101 = vmatpush1.msra.mxu0 0.0
    %102 = vmatprep.subr.mxu0 0.0
    %103 = vmatpush1.msra.mxu0 0.0
    %104 = vmatprep.subr.mxu0 0.0
    %105 = vmatpush1.msra.mxu0 0.0
    %106 = vmatprep.subr.mxu0 0.0
    %107 = vmatpush1.msra.mxu0 0.0
    %108 = vmatprep.subr.mxu0 0.0
    %109 = vmatpush1.msra.mxu0 0.0
    %110 = vmatprep.subr.mxu0 0.0
    %111 = vmatpush1.msra.mxu0 %v74
    %112 = vmatprep.subr.mxu0 0.0
    %113 = vmatpush1.msra.mxu0 %v73
    %114 = vmatprep.subr.mxu0 0.0
    %115 = vmatpush1.msra.mxu0 %v72
    %116 = vmatprep.subr.mxu0 0.0
    %117 = vmatpush1.msra.mxu0 %v71
    %118 = vmatprep.subr.mxu0 0.0
    %119 = vmatpush2.msra.mxu0 0.0
    %120 = vmatprep.subr.mxu0 0.0
    %121 = vmatpush2.msra.mxu0 0.0
    %122 = vmatprep.subr.mxu0 0.0
    %123 = vmatpush2.msra.mxu0 0.0
    %124 = vmatprep.subr.mxu0 0.0
    %125 = vmatpush2.msra.mxu0 0.0
    %126 = vmatprep.subr.mxu0 0.0
    %127 = vmatpush2.msra.mxu0 0.0
    %128 = vmatprep.subr.mxu0 0.0
    %129 = vmatpush2.msra.mxu0 0.0
    %130 = vmatprep.subr.mxu0 0.0
    %131 = vmatpush2.msra.mxu0 0.0
    %132 = vmatprep.subr.mxu0 0.0
    %133 = vmatpush2.msra.mxu0 0.0
    %134 = vmatprep.subr.mxu0 0.0
    %135 = vmatpush2.msra.mxu0 0.0
    %136 = vmatprep.subr.mxu0 0.0
    %137 = vmatpush2.msra.mxu0 0.0
    %138 = vmatprep.subr.mxu0 0.0
    %139 = vmatpush2.msra.mxu0 0.0
    %140 = vmatprep.subr.mxu0 0.0
    %141 = vmatpush2.msra.mxu0 0.0
    %142 = vmatprep.subr.mxu0 0.0
    %143 = vmatpush2.msra.mxu0 0.0
    %144 = vmatprep.subr.mxu0 0.0
    %145 = vmatpush2.msra.mxu0 0.0
    %146 = vmatprep.subr.mxu0 0.0
    %147 = vmatpush2.msra.mxu0 0.0
    %148 = vmatprep.subr.mxu0 0.0
    %149 = vmatpush2.msra.mxu0 0.0
    %150 = vmatprep.mubr.f32.mxu0 0.0
    %151 = vmatmul.mubr.f32.gmra.mxu0 %v84
    %v152 = vpop.f32.mrf.mxu0
    %v153 = vadd.f32 %v80, %v152
    %v154 = vpop.f32.mrf.mxu0
    %155 = vdwg.mxu0
    %v156 = vand.u32 2147483647, %v153
    %vm157 = vcmp.le.f32.partialorder %v156, 0.7853982
    %vm158 = vcmp.lt.s32.totalorder %v153, 0
    %v159 = vand.u32 %v153, 2139095040
    %v160 = vshrl.u32 %v159, 23
    %v161 = vsub.s32 %v160, 127
    %v162 = vand.u32 2147483647, %v153
    %v163 = vand.u32 %v162, 8388607
    %v164 = vor.u32 %v163, 8388608
    %v165 = vsub.s32 0, %v164
    %v166 = vadd.s32 %v161, 1
    %vm167 = vcmp.gt.s32.totalorder %v166, 0
    %v168 = vsel %vm167, %v166, 0
    %v169 = vshrl.u32 %v168, 5
    %v170 = vand.u32 %v168, 31
    %v171 = vsub.s32 32, %v170
    %v172 = vshrl.u32 683565275, %v171
    %v173 = vshll.u32 683565275, %v170
    %v174 = vshrl.u32 2475754826, %v171
    %v175 = vor.u32 %v173, %v174
    %v176 = vshll.u32 2475754826, %v170
    %v177 = vshrl.u32 2131351028, %v171
    %v178 = vor.u32 %v176, %v177
    %v179 = vshll.u32 2131351028, %v170
    %v180 = vshrl.u32 2102212464, %v171
    %v181 = vor.u32 %v179, %v180
    %v182 = vshll.u32 2102212464, %v170
    %v183 = vshrl.u32 920167782, %v171
    %v184 = vor.u32 %v182, %v183
    %v185 = vshll.u32 920167782, %v170
    %v186 = vshrl.u32 1326507024, %v171
    %v187 = vor.u32 %v185, %v186
    %vm188 = vcmp.lt.s32.totalorder %v169, 1
    %vm189 = vcmp.lt.s32.totalorder %v169, 2
    %vm190 = vcmp.lt.s32.totalorder %v169, 3
    %vm191 = vcmp.lt.s32.totalorder %v169, 4
    %v192 = vsel %vm188, %v172, %v175
    %v193 = vsel %vm191, %v181, 2102212464
    %v194 = vsel %vm190, %v178, %v193
    %v195 = vsel %vm189, %v192, %v194
    %v196 = vsel %vm188, %v175, %v178
    %v197 = vsel %vm191, %v184, 920167782
    %v198 = vsel %vm190, %v181, %v197
    %v199 = vsel %vm189, %v196, %v198
    %v200 = vsel %vm188, %v178, %v181
    %v201 = vsel %vm191, %v187, 1326507024
    %v202 = vsel %vm190, %v184, %v201
    %v203 = vsel %vm189, %v200, %v202
    %v204 = vshll.u32 %v164, 8
    %v205 = vmul.u32.u64.compose %v204, %v203
    %v206 = vextract.low.u32 %v205
    %v207 = vextract.high.u32 %v205
    %v208 = vmul.u32.u64.compose %v204, %v199
    %v209 = vextract.low.u32 %v208
    %v210 = vextract.high.u32 %v208
    %v211 = vmul.u32 %v204, %v195
    %v212 = vadd.s32 %v207, %v209
    %vm213 = vc.u32 %v207, %v209
    %v214 = vadd.s32 %v210, 1
    %v215 = vsel %vm213, %v214, %v210
    %v216 = vadd.s32 %v211, %v215
    %v217 = vadd.s32 %v216, 536870912
    %v218 = vshrl.u32 %v217, 30
    %v219 = vshll.u32 %v218, 30
    %v220 = vsub.s32 %v216, %v219
    %vm221 = vcmp.lt.s32.totalorder %v220, 0
    %v222 = vsub.s32 0, %v220
    %v223 = vsel %vm221, %v222, %v220
    %v224 = vclz %v223
    %v225 = vsub.s32 %v224, 2
    %vm226 = vcmp.gt.s32.totalorder 0, %v225
    %v227 = vsel %vm226, 0, %v225
    %v228 = vsub.s32 32, %v227
    %v229 = vshll.u32 %v220, %v227
    %v230 = vshrl.u32 %v212, %v228
    %v231 = vor.u32 %v229, %v230
    %v232 = vsub.s32 4294967266, %v227
    %v233 = vadd.s32 %v232, 127
    %v234 = vshll.u32 %v233, 23
    %v235 = vor.u32 4788187, %v234
    %v236 = vand.u32 2147483647, %v235
    %v238 = vcvt.s32.f32 %v231
    %v239 = vmul.f32 %v238, %v236
    %v240 = vxor.u32 %v239, 2147483648
    %v241 = vsel %vm158, %v240, %v239
    %v242 = vsub.s32 4, %v218
    %v243 = vsel %vm158, %v242, %v218
    %v244 = vsel %vm157, %v153, %v241
    %v245 = vsel %vm157, 0, %v243
    %v246 = vcosq.f32.pop %v244
    %v247 = vsinq.f32.pop %v244
    %vm248 = vweird.f32 %v153
    %v249 = vadd.s32 %v245, 3
    %v250 = vand.u32 %v249, 3
    %vm251 = vcmp.lt.s32.totalorder %v250, 2
    %vm252 = vcmp.eq.s32.totalorder %v250, 0
    %v253 = vxor.u32 %v247, 2147483648
    %v254 = vsel %vm252, %v246, %v253
    %vm255 = vcmp.eq.s32.totalorder %v250, 2
    %v256 = vxor.u32 %v246, 2147483648
    %v257 = vsel %vm255, %v256, %v247
    %v258 = vsel %vm251, %v254, %v257
    %v259 = vsel %vm248, nan, %v258
    %v260 = vld [vmem:[#allocation7] sm:$0xff]
    %v261 = vld [vmem:[#allocation8] sm:$0xff]
    %v262 = vsub.f32 %v261, %v260
    %v263 = vmul.f32 %v259, %v262
    %v264 = vadd.f32 %v263, %v260
    %265 = vst.msk [vmem:[#allocation10] sm:$0xff] %vm82, %v264
    // Predicated region
    $region38: #{tpu_custom_call.1} parent=1 // pred_check
      _
    $region39: #{tpu_custom_call.1} parent=1 // pred_check_branch
      %267 = sbr.rel (0) target = $region41
    $region40: #{tpu_custom_call.1} parent=1 // pred_region
      %s269 = ssub.s32 128, 128
      %270 = vsyncadd [#allocation4], %s269
      %s272 = sshll.u32 [#allocation10], 4
      %s273 = int_to_ptr.vmem [resolvable:$true] %s272
      %275 = dma.vmem_to_hbm [thread:$0]  %s273, 128, %s5, [#allocation4]
    $region41: #{tpu_custom_call.1} parent=1 // pred_fallthru
      _
    // Predicated region
    $region42: #{tpu_custom_call.1} parent=1 // pred_check
      _
    $region43: #{tpu_custom_call.1} parent=1 // pred_check_branch
      %277 = sbr.rel (0) target = $region45
    $region44: #{tpu_custom_call.1} parent=1 // pred_region
      %278 = dma.done [#allocation4], 128
    $region45: #{tpu_custom_call.1} parent=1 // pred_fallthru
      _
    %279 = vsyncpa [#allocation3], 1
    %280 = vsyncpa [#allocation6], 1
    %281 = vsyncpa [#allocation9], 1
    %282 = vsyncpa [#allocation4], 1

</llo_original>
